<compile_context>
chip_gen: v5e
topology: v5e:2x2
jax: 0.10.0
libtpu: 0.0.40
codegen_flags: <defaults>
</compile_context>

<pallas_src>
import functools

import numpy as np

import jax
import jax.numpy as jnp
from jax.experimental import pallas as pl
from jax.experimental.pallas import tpu as pltpu

_LANES = 128     # lane width of every slab (requires all model dims <= 128)
_MAX_BBLK = 64   # graphs per grid step; keeps >=2 parallel steps once B > 64
                 # so v7x's two TensorCores both get work on large batches.
                 # TODO(synk): raise to 128 for very large batches to make the
                 # Q store a fully unmasked 128-lane vst.


def _round_up(n, m):
    return -(-n // m) * m


# ----------------------------- Pallas kernel -------------------------------

def _critic_kernel(in_ref, pool_ref, w_ref, vec_ref, q_ref, *, n_pad, bblk):
    """One batch-block of graphs per grid step.

    in_ref  : (2*bblk*n_pad + bblk, 128) row-stacked [A_norms | Xs | actions]
    pool_ref: (bblk, bblk*n_pad)  constant mean-pool matrix (1/N entries)
    w_ref   : (4*128, 128)        row-stacked, zero-padded [W1 | W2 | W3h | W3a]
    vec_ref : (8, 128)            rows: b1, b2, b3, w4_row, [b4, 0, ...]
    q_ref   : (1, bblk)           Q for every graph of the block, lane-dense
    """
    f32 = jnp.float32
    npb = bblk * n_pad

    # Static sub-slices of the single per-step input slab (8-aligned rows).
    a = in_ref[0:npb, 0:n_pad].reshape(bblk, n_pad, n_pad)   # (bblk, Np, Np)
    x = in_ref[npb:2 * npb, :]                               # (bblk*Np, 128)
    act = in_ref[2 * npb:2 * npb + bblk, :]                  # (bblk, 128)

    # Resident, 128-lane weight regions.
    w1 = w_ref[0:_LANES, :]
    w2 = w_ref[_LANES:2 * _LANES, :]
    w3h = w_ref[2 * _LANES:3 * _LANES, :]
    w3a = w_ref[3 * _LANES:4 * _LANES, :]
    b1 = vec_ref[0:1, :]
    b2 = vec_ref[1:2, :]
    b3 = vec_ref[2:3, :]
    w4 = vec_ref[3:4, :]
    b4 = vec_ref[4:5, 0:1]

    # GCN layer 1: relu(A_norm @ (X @ W1) + b1), batched over the block.
    xw = jnp.dot(x, w1, preferred_element_type=f32).reshape(bblk, n_pad, _LANES)
    h = jnp.einsum("bij,bjh->bih", a, xw, preferred_element_type=f32)
    h = jnp.maximum(h.reshape(npb, _LANES) + b1, 0.0)

    # GCN layer 2: relu(A_norm @ (h @ W2) + b2).
    hw = jnp.dot(h, w2, preferred_element_type=f32).reshape(bblk, n_pad, _LANES)
    h = jnp.maximum(
        jnp.einsum("bij,bjh->bih", a, hw,
                   preferred_element_type=f32).reshape(npb, _LANES) + b2, 0.0)

    # Mean pool over each graph's real nodes as an MXU matmul with the
    # constant pooling matrix (also drops zero-padded node/batch rows).
    pooled = jnp.dot(pool_ref[...], h, preferred_element_type=f32)  # (bblk,128)

    # concat([pooled, action]) @ W3 expressed as a split matmul (no lane concat).
    z = (jnp.dot(pooled, w3h, preferred_element_type=f32)
         + jnp.dot(act, w3a, preferred_element_type=f32) + b3)
    z = jnp.maximum(z, 0.0)

    # Final linear (out features = 1): land Q lane-dense across the block.
    q_ref[...] = jnp.dot(w4, z.T, preferred_element_type=f32) + b4


# ------------------------------ param packing ------------------------------

def pack_critic_params(params):
    """Pack critic weights into two resident 128-lane slabs.  Call ONCE when
    the parameters are created/updated (hoisted out of the jitted forward)."""
    w1 = jnp.asarray(params["w1"], jnp.float32)
    w2 = jnp.asarray(params["w2"], jnp.float32)
    w3 = jnp.asarray(params["w3"], jnp.float32)
    w4 = jnp.asarray(params["w4"], jnp.float32)
    f, h = w1.shape
    ha, m = w3.shape
    a = ha - h
    if max(f, h, m, a) > _LANES:
        raise ValueError("all critic dims must be <= 128 for this kernel")

    # Each weight region is 128 rows so its contraction dim matches the
    # 128-lane (zero padded) activations; padded rows/cols are zero -> exact.
    w_slab = jnp.zeros((4 * _LANES, _LANES), jnp.float32)
    w_slab = w_slab.at[0:f, 0:h].set(w1)
    w_slab = w_slab.at[_LANES:_LANES + h, 0:h].set(w2)
    w_slab = w_slab.at[2 * _LANES:2 * _LANES + h, 0:m].set(w3[:h])
    w_slab = w_slab.at[3 * _LANES:3 * _LANES + a, 0:m].set(w3[h:])

    vec_slab = jnp.zeros((8, _LANES), jnp.float32)
    vec_slab = vec_slab.at[0, 0:h].set(jnp.asarray(params["b1"], jnp.float32))
    vec_slab = vec_slab.at[1, 0:h].set(jnp.asarray(params["b2"], jnp.float32))
    vec_slab = vec_slab.at[2, 0:m].set(jnp.asarray(params["b3"], jnp.float32))
    vec_slab = vec_slab.at[3, 0:m].set(w4.reshape(m))
    vec_slab = vec_slab.at[4, 0].set(
        jnp.asarray(params["b4"], jnp.float32).reshape(()))
    return {"w": w_slab, "vec": vec_slab}


# --------------------------------- glue ------------------------------------

def gcn_norm_adj(edge_index, num_nodes):
    """Dense D^{-1/2}(A+I)D^{-1/2} from edge_index (2, E). Plain-JAX glue."""
    src, dst = edge_index[0], edge_index[1]
    a = jnp.zeros((num_nodes, num_nodes), jnp.float32)
    a = a.at[dst, src].add(1.0)          # scatter-add: duplicate edges accumulate
    a = a + jnp.eye(num_nodes, dtype=jnp.float32)
    deg = a.sum(axis=1)
    d_inv_sqrt = 1.0 / jnp.sqrt(jnp.maximum(deg, 1e-12))
    return d_inv_sqrt[:, None] * a * d_inv_sqrt[None, :]


def init_critic_params(key, in_feats, action_dim, gcn_hidden, mlp_hidden):
    """Deterministic synthetic parameters (weights stored as (in, out))."""
    ks = jax.random.split(key, 8)
    s = lambda fan_in: 1.0 / jnp.sqrt(jnp.float32(fan_in))
    return {
        "w1": jax.random.uniform(ks[0], (in_feats, gcn_hidden), jnp.float32,
                                 -s(in_feats), s(in_feats)),
        "b1": jax.random.uniform(ks[1], (gcn_hidden,), jnp.float32,
                                 -s(in_feats), s(in_feats)),
        "w2": jax.random.uniform(ks[2], (gcn_hidden, gcn_hidden), jnp.float32,
                                 -s(gcn_hidden), s(gcn_hidden)),
        "b2": jax.random.uniform(ks[3], (gcn_hidden,), jnp.float32,
                                 -s(gcn_hidden), s(gcn_hidden)),
        "w3": jax.random.uniform(ks[4], (gcn_hidden + action_dim, mlp_hidden),
                                 jnp.float32,
                                 -s(gcn_hidden + action_dim),
                                 s(gcn_hidden + action_dim)),
        "b3": jax.random.uniform(ks[5], (mlp_hidden,), jnp.float32,
                                 -s(gcn_hidden + action_dim),
                                 s(gcn_hidden + action_dim)),
        "w4": jax.random.uniform(ks[6], (mlp_hidden, 1), jnp.float32,
                                 -s(mlp_hidden), s(mlp_hidden)),
        "b4": jax.random.uniform(ks[7], (1,), jnp.float32,
                                 -s(mlp_hidden), s(mlp_hidden)),
    }


def _fit_action(action, action_dim):
    """Mirror the torch pad / truncate branches (static-shape decisions)."""
    ad = action.shape[-1]
    if ad < action_dim:
        pad = jnp.zeros(action.shape[:-1] + (action_dim - ad,), action.dtype)
        action = jnp.concatenate([action, pad], axis=-1)
    elif ad > action_dim:
        action = action[..., :action_dim]
    return action


@functools.partial(jax.jit, static_argnames=("action_dim",))
def critic_forward(x, a_norm, action, w_slab, vec_slab, *, action_dim):
    """x: (N,F) or (B,N,F); a_norm: (N,N) or (B,N,N); action: (A,) or (B,A)."""
    single = x.ndim == 2
    if single:
        x, a_norm, action = x[None], a_norm[None], action[None]

    x = x.astype(jnp.float32)
    a_norm = a_norm.astype(jnp.float32)
    action = _fit_action(action.astype(jnp.float32), action_dim)

    B, N, F = x.shape
    A = action_dim
    if max(N, F, A) > _LANES:
        raise ValueError("N, F and action_dim must be <= 128 for this kernel")

    n_pad = _round_up(N, 8)
    # Graphs per grid step: whole (8-padded) batch for small B (overhead
    # dominated -> a single step); capped at _MAX_BBLK so large batches keep
    # >= 2 "parallel" steps for v7x's two TensorCores.
    bblk = min(_round_up(B, 8), _MAX_BBLK)
    num_blocks = pl.cdiv(B, bblk)
    b_pad = num_blocks * bblk
    npb = bblk * n_pad
    rblk = 2 * npb + bblk

    # ONE row-stacked, 128-lane input slab per batch block: [A_norms|Xs|acts].
    a_rows = jnp.pad(a_norm, ((0, b_pad - B), (0, n_pad - N), (0, _LANES - N)))
    x_rows = jnp.pad(x, ((0, b_pad - B), (0, n_pad - N), (0, _LANES - F)))
    act_rows = jnp.pad(action, ((0, b_pad - B), (0, _LANES - A)))
    in_blocks = jnp.concatenate(
        [a_rows.reshape(num_blocks, npb, _LANES),
         x_rows.reshape(num_blocks, npb, _LANES),
         act_rows.reshape(num_blocks, bblk, _LANES)], axis=1)

    # Constant mean-pool matrix: averages each graph's N real node rows and
    # drops padded rows.  Built with numpy -> embedded as a compile-time const.
    pool_np = np.zeros((bblk, npb), np.float32)
    for i in range(bblk):
        pool_np[i, i * n_pad:i * n_pad + N] = 1.0 / N
    pool = jnp.asarray(pool_np)

    kernel = functools.partial(_critic_kernel, n_pad=n_pad, bblk=bblk)
    q = pl.pallas_call(
        kernel,
        out_shape=jax.ShapeDtypeStruct((num_blocks, 1, bblk), jnp.float32),
        grid=(num_blocks,),
        in_specs=[
            pl.BlockSpec((None, rblk, _LANES), lambda g: (g, 0, 0)),  # per-step slab
            pl.BlockSpec(pool.shape, lambda g: (0, 0)),               # resident
            pl.BlockSpec(w_slab.shape, lambda g: (0, 0)),             # resident
            pl.BlockSpec(vec_slab.shape, lambda g: (0, 0)),           # resident
        ],
        out_specs=pl.BlockSpec((None, 1, bblk), lambda g: (g, 0, 0)),
        compiler_params=pltpu.CompilerParams(
            dimension_semantics=("parallel",)),
    )(in_blocks, pool, w_slab, vec_slab)

    q = q.reshape(num_blocks * bblk)[:B].reshape(B, 1)
    return q[0] if single else q   # (1,) like the torch module, or (B, 1)


# ------------------------------- reference ---------------------------------

def critic_reference(x, a_norm, action, params, action_dim):
    h = jnp.maximum(a_norm @ (x @ params["w1"]) + params["b1"], 0.0)
    h = jnp.maximum(a_norm @ (h @ params["w2"]) + params["b2"], 0.0)
    pooled = h.mean(axis=0)
    action = _fit_action(action, action_dim)
    combined = jnp.concatenate([pooled, action], axis=-1)
    z = jnp.maximum(combined @ params["w3"] + params["b3"], 0.0)
    return z @ params["w4"] + params["b4"]   # (1,)


# --------------------------------- main -------------------------------------

if __name__ == "__main__":
    B, N, IN_FEATS, GCN_HIDDEN, MLP_HIDDEN, ACTION_DIM = 4, 8, 16, 32, 32, 16

    key = jax.random.PRNGKey(0)
    k_x, k_a, k_p = jax.random.split(key, 3)

    x = jax.random.normal(k_x, (B, N, IN_FEATS), jnp.float32)
    action = jax.random.normal(k_a, (B, ACTION_DIM), jnp.float32)
    params = init_critic_params(k_p, IN_FEATS, ACTION_DIM, GCN_HIDDEN, MLP_HIDDEN)

    # Pack the parameter slabs ONCE (hoisted out of the jitted forward).
    packed = pack_critic_params(params)

    # Deterministic graphs: symmetric ring + one batch-dependent chord (0, 2+b).
    base = jnp.arange(N, dtype=jnp.int32)
    a_norms = []
    for b in range(B):
        u = jnp.concatenate([base, jnp.array([0], jnp.int32)])
        v = jnp.concatenate([(base + 1) % N, jnp.array([(2 + b) % N], jnp.int32)])
        edge_index = jnp.stack([jnp.concatenate([u, v]),
                                jnp.concatenate([v, u])], axis=0)
        a_norms.append(gcn_norm_adj(edge_index, N))
    a_norm = jnp.stack(a_norms, axis=0)

    # Batched evaluation through the Pallas kernel.
    q = critic_forward(x, a_norm, action, packed["w"], packed["vec"],
                       action_dim=ACTION_DIM)
    q = jax.block_until_ready(q)

    for b in range(B):
        q_ref = critic_reference(x[b], a_norm[b], action[b], params, ACTION_DIM)
        assert jnp.allclose(q[b], q_ref, atol=1e-4, rtol=1e-4), (b, q[b], q_ref)

    # Single-graph path (mirrors the torch module's unbatched forward).
    q1 = critic_forward(x[0], a_norm[0], action[0], packed["w"], packed["vec"],
                        action_dim=ACTION_DIM)
    q1 = jax.block_until_ready(q1)
    q1_ref = critic_reference(x[0], a_norm[0], action[0], params, ACTION_DIM)
    assert jnp.allclose(q1, q1_ref, atol=1e-4, rtol=1e-4), (q1, q1_ref)

    print("KERNEL_OK")
</pallas_src>

<mosaic_0001>
module attributes {stable_mosaic.version = 11 : i64} {
  func.func @_critic_kernel(%arg0: i32, %arg1: memref<1x136x128xf32, #tpu.memory_space<vmem>>, %arg2: memref<8x64xf32, #tpu.memory_space<vmem>>, %arg3: memref<512x128xf32, #tpu.memory_space<vmem>>, %arg4: memref<8x128xf32, #tpu.memory_space<vmem>>, %arg5: memref<1x1x8xf32, #tpu.memory_space<vmem>>) attributes {dimension_semantics = [#tpu.dimension_semantics<parallel>], iteration_bounds = array<i64: 1>, scalar_prefetch = 0 : i64, scratch_operands = 0 : i64, tpu.core_type = #tpu.core_type<tc>, window_params = [{transform_indices = @transform_0, window_bounds = array<i64: 1, 136, 128>}, {pipeline_mode = #tpu.pipeline_mode<synchronous>, transform_indices = @transform_1, window_bounds = array<i64: 8, 64>}, {pipeline_mode = #tpu.pipeline_mode<synchronous>, transform_indices = @transform_2, window_bounds = array<i64: 512, 128>}, {pipeline_mode = #tpu.pipeline_mode<synchronous>, transform_indices = @transform_3, window_bounds = array<i64: 8, 128>}, {transform_indices = @transform_4, window_bounds = array<i64: 1, 1, 8>}]} {
    %c0 = arith.constant 0 : index
    %c0_0 = arith.constant 0 : index
    %c0_1 = arith.constant 0 : index
    %0 = vector.load %arg1[%c0, %c0_0, %c0_1] : memref<1x136x128xf32, #tpu.memory_space<vmem>>, vector<1x64x8xf32>
    %1 = vector.shape_cast %0 : vector<1x64x8xf32> to vector<64x8xf32>
    %2 = vector.shape_cast %1 : vector<64x8xf32> to vector<8x8x8xf32>
    %c0_2 = arith.constant 0 : index
    %c64 = arith.constant 64 : index
    %c0_3 = arith.constant 0 : index
    %3 = vector.load %arg1[%c0_2, %c64, %c0_3] : memref<1x136x128xf32, #tpu.memory_space<vmem>>, vector<1x64x128xf32>
    %4 = vector.shape_cast %3 : vector<1x64x128xf32> to vector<64x128xf32>
    %c0_4 = arith.constant 0 : index
    %c128 = arith.constant 128 : index
    %c0_5 = arith.constant 0 : index
    %5 = vector.load %arg1[%c0_4, %c128, %c0_5] : memref<1x136x128xf32, #tpu.memory_space<vmem>>, vector<1x8x128xf32>
    %6 = vector.shape_cast %5 : vector<1x8x128xf32> to vector<8x128xf32>
    %c0_6 = arith.constant 0 : index
    %c0_7 = arith.constant 0 : index
    %7 = vector.load %arg3[%c0_6, %c0_7] : memref<512x128xf32, #tpu.memory_space<vmem>>, vector<128x128xf32>
    %c128_8 = arith.constant 128 : index
    %c0_9 = arith.constant 0 : index
    %8 = vector.load %arg3[%c128_8, %c0_9] : memref<512x128xf32, #tpu.memory_space<vmem>>, vector<128x128xf32>
    %c256 = arith.constant 256 : index
    %c0_10 = arith.constant 0 : index
    %9 = vector.load %arg3[%c256, %c0_10] : memref<512x128xf32, #tpu.memory_space<vmem>>, vector<128x128xf32>
    %c384 = arith.constant 384 : index
    %c0_11 = arith.constant 0 : index
    %10 = vector.load %arg3[%c384, %c0_11] : memref<512x128xf32, #tpu.memory_space<vmem>>, vector<128x128xf32>
    %c0_12 = arith.constant 0 : index
    %c0_13 = arith.constant 0 : index
    %11 = vector.load %arg4[%c0_12, %c0_13] : memref<8x128xf32, #tpu.memory_space<vmem>>, vector<1x128xf32>
    %c1 = arith.constant 1 : index
    %c0_14 = arith.constant 0 : index
    %12 = vector.load %arg4[%c1, %c0_14] : memref<8x128xf32, #tpu.memory_space<vmem>>, vector<1x128xf32>
    %c2 = arith.constant 2 : index
    %c0_15 = arith.constant 0 : index
    %13 = vector.load %arg4[%c2, %c0_15] : memref<8x128xf32, #tpu.memory_space<vmem>>, vector<1x128xf32>
    %c3 = arith.constant 3 : index
    %c0_16 = arith.constant 0 : index
    %14 = vector.load %arg4[%c3, %c0_16] : memref<8x128xf32, #tpu.memory_space<vmem>>, vector<1x128xf32>
    %c4 = arith.constant 4 : index
    %c0_17 = arith.constant 0 : index
    %15 = vector.load %arg4[%c4, %c0_17] : memref<8x128xf32, #tpu.memory_space<vmem>>, vector<1x1xf32>
    %cst = arith.constant dense<0.000000e+00> : vector<64x128xf32>
    %16 = tpu.matmul %4, %7, %cst {dimension_numbers = #tpu.dot_dimension_numbers<[1], [0], [0], [1], [0, 0, 1, 1], [], []>} : vector<64x128xf32>, vector<128x128xf32>, vector<64x128xf32> -> vector<64x128xf32>
    %17 = vector.shape_cast %16 : vector<64x128xf32> to vector<8x8x128xf32>
    "tpu.trace_start"() <{level = 10 : i32, message = "bij,bjh->bih"}> : () -> ()
    %cst_18 = arith.constant dense<0.000000e+00> : vector<8x8x128xf32>
    %18 = tpu.matmul %2, %17, %cst_18 {dimension_numbers = #tpu.dot_dimension_numbers<[2], [1], [1], [2], [0, 0, 0, 1, 1, 2], [0], [0]>} : vector<8x8x8xf32>, vector<8x8x128xf32>, vector<8x8x128xf32> -> vector<8x8x128xf32>
    "tpu.trace_stop"() : () -> ()
    %19 = vector.shape_cast %18 : vector<8x8x128xf32> to vector<64x128xf32>
    %20 = vector.broadcast %11 : vector<1x128xf32> to vector<64x128xf32>
    %21 = arith.addf %19, %20 : vector<64x128xf32>
    %cst_19 = arith.constant 0.000000e+00 : f32
    %22 = vector.broadcast %cst_19 : f32 to vector<64x128xf32>
    %23 = arith.maximumf %21, %22 : vector<64x128xf32>
    %cst_20 = arith.constant dense<0.000000e+00> : vector<64x128xf32>
    %24 = tpu.matmul %23, %8, %cst_20 {dimension_numbers = #tpu.dot_dimension_numbers<[1], [0], [0], [1], [0, 0, 1, 1], [], []>} : vector<64x128xf32>, vector<128x128xf32>, vector<64x128xf32> -> vector<64x128xf32>
    %25 = vector.shape_cast %24 : vector<64x128xf32> to vector<8x8x128xf32>
    "tpu.trace_start"() <{level = 10 : i32, message = "bij,bjh->bih"}> : () -> ()
    %cst_21 = arith.constant dense<0.000000e+00> : vector<8x8x128xf32>
    %26 = tpu.matmul %2, %25, %cst_21 {dimension_numbers = #tpu.dot_dimension_numbers<[2], [1], [1], [2], [0, 0, 0, 1, 1, 2], [0], [0]>} : vector<8x8x8xf32>, vector<8x8x128xf32>, vector<8x8x128xf32> -> vector<8x8x128xf32>
    "tpu.trace_stop"() : () -> ()
    %27 = vector.shape_cast %26 : vector<8x8x128xf32> to vector<64x128xf32>
    %28 = vector.broadcast %12 : vector<1x128xf32> to vector<64x128xf32>
    %29 = arith.addf %27, %28 : vector<64x128xf32>
    %cst_22 = arith.constant 0.000000e+00 : f32
    %30 = vector.broadcast %cst_22 : f32 to vector<64x128xf32>
    %31 = arith.maximumf %29, %30 : vector<64x128xf32>
    %c0_23 = arith.constant 0 : index
    %c0_24 = arith.constant 0 : index
    %32 = vector.load %arg2[%c0_23, %c0_24] : memref<8x64xf32, #tpu.memory_space<vmem>>, vector<8x64xf32>
    %cst_25 = arith.constant dense<0.000000e+00> : vector<8x128xf32>
    %33 = tpu.matmul %32, %31, %cst_25 {dimension_numbers = #tpu.dot_dimension_numbers<[1], [0], [0], [1], [0, 0, 1, 1], [], []>} : vector<8x64xf32>, vector<64x128xf32>, vector<8x128xf32> -> vector<8x128xf32>
    %cst_26 = arith.constant dense<0.000000e+00> : vector<8x128xf32>
    %34 = tpu.matmul %33, %9, %cst_26 {dimension_numbers = #tpu.dot_dimension_numbers<[1], [0], [0], [1], [0, 0, 1, 1], [], []>} : vector<8x128xf32>, vector<128x128xf32>, vector<8x128xf32> -> vector<8x128xf32>
    %cst_27 = arith.constant dense<0.000000e+00> : vector<8x128xf32>
    %35 = tpu.matmul %6, %10, %cst_27 {dimension_numbers = #tpu.dot_dimension_numbers<[1], [0], [0], [1], [0, 0, 1, 1], [], []>} : vector<8x128xf32>, vector<128x128xf32>, vector<8x128xf32> -> vector<8x128xf32>
    %36 = arith.addf %34, %35 : vector<8x128xf32>
    %37 = vector.broadcast %13 : vector<1x128xf32> to vector<8x128xf32>
    %38 = arith.addf %36, %37 : vector<8x128xf32>
    %cst_28 = arith.constant 0.000000e+00 : f32
    %39 = vector.broadcast %cst_28 : f32 to vector<8x128xf32>
    %40 = arith.maximumf %38, %39 : vector<8x128xf32>
    %41 = tpu.transpose %40, [1, 0] : vector<8x128xf32> -> vector<128x8xf32>
    %cst_29 = arith.constant dense<0.000000e+00> : vector<1x8xf32>
    %42 = tpu.matmul %14, %41, %cst_29 {dimension_numbers = #tpu.dot_dimension_numbers<[1], [0], [0], [1], [0, 0, 1, 1], [], []>} : vector<1x128xf32>, vector<128x8xf32>, vector<1x8xf32> -> vector<1x8xf32>
    %43 = vector.broadcast %15 : vector<1x1xf32> to vector<1x8xf32>
    %44 = arith.addf %42, %43 : vector<1x8xf32>
    %c0_30 = arith.constant 0 : index
    %c0_31 = arith.constant 0 : index
    %c0_32 = arith.constant 0 : index
    %45 = vector.load %arg5[%c0_30, %c0_31, %c0_32] : memref<1x1x8xf32, #tpu.memory_space<vmem>>, vector<1x1x8xf32>
    %46 = vector.shape_cast %45 : vector<1x1x8xf32> to vector<1x8xf32>
    %47 = vector.shape_cast %44 : vector<1x8xf32> to vector<1x1x8xf32>
    tpu.vector_store %arg5[%c0_30, %c0_31, %c0_32], %47 {strides = array<i32>} : memref<1x1x8xf32, #tpu.memory_space<vmem>>, vector<1x1x8xf32>,
    return
  }
  func.func @transform_0(%arg0: i32) -> (i32, i32, i32) {
    %c0_i32 = arith.constant 0 : i32
    %c0_i32_0 = arith.constant 0 : i32
    %c0_i32_1 = arith.constant 0 : i32
    return %arg0, %c0_i32, %c0_i32_0 : i32, i32, i32
  }
  func.func @transform_1(%arg0: i32) -> (i32, i32) {
    %c0_i32 = arith.constant 0 : i32
    %c0_i32_0 = arith.constant 0 : i32
    %c0_i32_1 = arith.constant 0 : i32
    return %c0_i32, %c0_i32_0 : i32, i32
  }
  func.func @transform_2(%arg0: i32) -> (i32, i32) {
    %c0_i32 = arith.constant 0 : i32
    %c0_i32_0 = arith.constant 0 : i32
    %c0_i32_1 = arith.constant 0 : i32
    return %c0_i32, %c0_i32_0 : i32, i32
  }
  func.func @transform_3(%arg0: i32) -> (i32, i32) {
    %c0_i32 = arith.constant 0 : i32
    %c0_i32_0 = arith.constant 0 : i32
    %c0_i32_1 = arith.constant 0 : i32
    return %c0_i32, %c0_i32_0 : i32, i32
  }
  func.func @transform_4(%arg0: i32) -> (i32, i32, i32) {
    %c0_i32 = arith.constant 0 : i32
    %c0_i32_0 = arith.constant 0 : i32
    %c0_i32_1 = arith.constant 0 : i32
    return %arg0, %c0_i32, %c0_i32_0 : i32, i32, i32
  }
}

</mosaic_0001>

<llo_original>
// kernel: critic_forward.1
$region0: #{critic_forward.1}
  #allocation0 [shape = 'u32[]', space=smem, size = 0x4, offset = 0x4, fixed_abs, tag = 'smem constant byte address 0x4 - core index']
  #allocation1 [shape = 'u32[72,128]{1,0:T(1,128)}', space=vmem, size = 0x9000, scoped, tag = 'internal scratch']
  %s0 = inlined_call_operand.vmem [shape: f32[1,136,128], index: 0, kind: input, shape index: {}]
  %s1 = inlined_call_operand.vmem [shape: f32[8,64], index: 1, kind: input, shape index: {}]
  %s2 = inlined_call_operand.hbm [shape: f32[512,128], index: 2, kind: input, shape index: {}]
  %s3 = inlined_call_operand.vmem [shape: f32[8,128], index: 3, kind: input, shape index: {}]
  %s4 = inlined_call_operand.vmem [shape: f32[1,1,8], index: 4, kind: output, shape index: {}]
  %s5 = sld [smem:[#allocation0]]
  $region30: #{critic_forward.1} parent=0
    _
  %s7 = ssub.s32 1, %s5
  %s8 = scalar_select 0, %s7, %s5
  $region1: #{critic_forward.1} parent=0
    #allocation2 [shape = 'u8[262144]{0}', space=vmem, size = 0x40000, scoped, tag = 'input window, operand 2, single buffered']
    #allocation3 [shape = 's32[1]{0}', space=sflag, size = 0x4, scoped, tag = 'scoped memory for critic_forward.1']
    %9 = vsyncpa [#allocation3], 0
    // Predicated region
    $region2: #{critic_forward.1} parent=1 // pred_check
      _
    $region3: #{critic_forward.1} parent=1 // pred_check_branch
      %11 = sbr.rel (0) target = $region5
    $region4: #{critic_forward.1} parent=1 // pred_region
      _
    $region5: #{critic_forward.1} parent=1 // pred_fallthru
      _
    // Predicated region
    $region6: #{critic_forward.1} parent=1 // pred_check
      _
    $region7: #{critic_forward.1} parent=1 // pred_check_branch
      %13 = sbr.rel (0) target = $region9
    $region8: #{critic_forward.1} parent=1 // pred_region
      _
    $region9: #{critic_forward.1} parent=1 // pred_fallthru
      _
    // Predicated region
    $region10: #{critic_forward.1} parent=1 // pred_check
      _
    $region11: #{critic_forward.1} parent=1 // pred_check_branch
      %15 = sbr.rel (0) target = $region13
    $region12: #{critic_forward.1} parent=1 // pred_region
      %17 = vsyncadd [#allocation3], 0
      %s18 = sshll.u32 %s2, 4
      %s19 = int_to_ptr.hbm [resolvable:$true] %s18
      %s20 = sshll.u32 [#allocation2], 4
      %s21 = int_to_ptr.vmem [resolvable:$true] %s20
      %26 = dma.hbm_to_vmem [thread:$0]  %s19, 8192, %s21, [#allocation3], 128, 128, 8
    $region13: #{critic_forward.1} parent=1 // pred_fallthru
      _
    // Predicated region
    $region14: #{critic_forward.1} parent=1 // pred_check
      _
    $region15: #{critic_forward.1} parent=1 // pred_check_branch
      %28 = sbr.rel (0) target = $region17
    $region16: #{critic_forward.1} parent=1 // pred_region
      _
    $region17: #{critic_forward.1} parent=1 // pred_fallthru
      _
    // Predicated region
    $region18: #{critic_forward.1} parent=1 // pred_check
      _
    $region19: #{critic_forward.1} parent=1 // pred_check_branch
      %30 = sbr.rel (0) target = $region21
    $region20: #{critic_forward.1} parent=1 // pred_region
      %32 = dma.done [#allocation3], 8192
    $region21: #{critic_forward.1} parent=1 // pred_fallthru
      _
    %v33 = vld [vmem:[%s0] sm:$0xff]
    %v34 = vld [vmem:[%s0 + $0x8] sm:$0xff]
    %v35 = vld [vmem:[%s0 + $0x10] sm:$0xff]
    %v36 = vld [vmem:[%s0 + $0x18] sm:$0xff]
    %v37 = vld [vmem:[%s0 + $0x20] sm:$0xff]
    %v38 = vld [vmem:[%s0 + $0x28] sm:$0xff]
    %v39 = vld [vmem:[%s0 + $0x30] sm:$0xff]
    %v40 = vld [vmem:[%s0 + $0x38] sm:$0xff]
    %v41 = vld [vmem:[%s0 + $0x40] sm:$0xff]
    %v42 = vld [vmem:[%s0 + $0x48] sm:$0xff]
    %v43 = vld [vmem:[%s0 + $0x50] sm:$0xff]
    %v44 = vld [vmem:[%s0 + $0x58] sm:$0xff]
    %v45 = vld [vmem:[%s0 + $0x60] sm:$0xff]
    %v46 = vld [vmem:[%s0 + $0x68] sm:$0xff]
    %v47 = vld [vmem:[%s0 + $0x70] sm:$0xff]
    %v48 = vld [vmem:[%s0 + $0x78] sm:$0xff]
    %v49 = vld [vmem:[%s0 + $0x80] sm:$0xff]
    %v50 = vld [vmem:[#allocation2] sm:$0xff]
    %v51 = vld [vmem:[#allocation2 + $0x8] sm:$0xff]
    %v52 = vld [vmem:[#allocation2 + $0x10] sm:$0xff]
    %v53 = vld [vmem:[#allocation2 + $0x18] sm:$0xff]
    %v54 = vld [vmem:[#allocation2 + $0x20] sm:$0xff]
    %v55 = vld [vmem:[#allocation2 + $0x28] sm:$0xff]
    %v56 = vld [vmem:[#allocation2 + $0x30] sm:$0xff]
    %v57 = vld [vmem:[#allocation2 + $0x38] sm:$0xff]
    %v58 = vld [vmem:[#allocation2 + $0x40] sm:$0xff]
    %v59 = vld [vmem:[#allocation2 + $0x48] sm:$0xff]
    %v60 = vld [vmem:[#allocation2 + $0x50] sm:$0xff]
    %v61 = vld [vmem:[#allocation2 + $0x58] sm:$0xff]
    %v62 = vld [vmem:[#allocation2 + $0x60] sm:$0xff]
    %v63 = vld [vmem:[#allocation2 + $0x68] sm:$0xff]
    %v64 = vld [vmem:[#allocation2 + $0x70] sm:$0xff]
    %v65 = vld [vmem:[#allocation2 + $0x78] sm:$0xff]
    %v66 = vld [vmem:[#allocation2 + $0x80] sm:$0xff]
    %v67 = vld [vmem:[#allocation2 + $0x88] sm:$0xff]
    %v68 = vld [vmem:[#allocation2 + $0x90] sm:$0xff]
    %v69 = vld [vmem:[#allocation2 + $0x98] sm:$0xff]
    %v70 = vld [vmem:[#allocation2 + $0xa0] sm:$0xff]
    %v71 = vld [vmem:[#allocation2 + $0xa8] sm:$0xff]
    %v72 = vld [vmem:[#allocation2 + $0xb0] sm:$0xff]
    %v73 = vld [vmem:[#allocation2 + $0xb8] sm:$0xff]
    %v74 = vld [vmem:[#allocation2 + $0xc0] sm:$0xff]
    %v75 = vld [vmem:[#allocation2 + $0xc8] sm:$0xff]
    %v76 = vld [vmem:[#allocation2 + $0xd0] sm:$0xff]
    %v77 = vld [vmem:[#allocation2 + $0xd8] sm:$0xff]
    %v78 = vld [vmem:[#allocation2 + $0xe0] sm:$0xff]
    %v79 = vld [vmem:[#allocation2 + $0xe8] sm:$0xff]
    %v80 = vld [vmem:[#allocation2 + $0xf0] sm:$0xff]
    %v81 = vld [vmem:[#allocation2 + $0xf8] sm:$0xff]
    %v82 = vld [vmem:[#allocation2 + $0x100] sm:$0xff]
    %v83 = vld [vmem:[#allocation2 + $0x108] sm:$0xff]
    %v84 = vld [vmem:[#allocation2 + $0x110] sm:$0xff]
    %v85 = vld [vmem:[#allocation2 + $0x118] sm:$0xff]
    %v86 = vld [vmem:[#allocation2 + $0x120] sm:$0xff]
    %v87 = vld [vmem:[#allocation2 + $0x128] sm:$0xff]
    %v88 = vld [vmem:[#allocation2 + $0x130] sm:$0xff]
    %v89 = vld [vmem:[#allocation2 + $0x138] sm:$0xff]
    %v90 = vld [vmem:[#allocation2 + $0x140] sm:$0xff]
    %v91 = vld [vmem:[#allocation2 + $0x148] sm:$0xff]
    %v92 = vld [vmem:[#allocation2 + $0x150] sm:$0xff]
    %v93 = vld [vmem:[#allocation2 + $0x158] sm:$0xff]
    %v94 = vld [vmem:[#allocation2 + $0x160] sm:$0xff]
    %v95 = vld [vmem:[#allocation2 + $0x168] sm:$0xff]
    %v96 = vld [vmem:[#allocation2 + $0x170] sm:$0xff]
    %v97 = vld [vmem:[#allocation2 + $0x178] sm:$0xff]
    %v98 = vld [vmem:[#allocation2 + $0x180] sm:$0xff]
    %v99 = vld [vmem:[#allocation2 + $0x188] sm:$0xff]
    %v100 = vld [vmem:[#allocation2 + $0x190] sm:$0xff]
    %v101 = vld [vmem:[#allocation2 + $0x198] sm:$0xff]
    %v102 = vld [vmem:[#allocation2 + $0x1a0] sm:$0xff]
    %v103 = vld [vmem:[#allocation2 + $0x1a8] sm:$0xff]
    %v104 = vld [vmem:[#allocation2 + $0x1b0] sm:$0xff]
    %v105 = vld [vmem:[#allocation2 + $0x1b8] sm:$0xff]
    %v106 = vld [vmem:[#allocation2 + $0x1c0] sm:$0xff]
    %v107 = vld [vmem:[#allocation2 + $0x1c8] sm:$0xff]
    %v108 = vld [vmem:[#allocation2 + $0x1d0] sm:$0xff]
    %v109 = vld [vmem:[#allocation2 + $0x1d8] sm:$0xff]
    %v110 = vld [vmem:[#allocation2 + $0x1e0] sm:$0xff]
    %v111 = vld [vmem:[#allocation2 + $0x1e8] sm:$0xff]
    %v112 = vld [vmem:[#allocation2 + $0x1f0] sm:$0xff]
    %v113 = vld [vmem:[#allocation2 + $0x1f8] sm:$0xff]
    %v114 = vld [vmem:[%s3] sm:$0x1]
    %v115 = vld [vmem:[%s3 + $0x1] sm:$0x1]
    %v116 = vld [vmem:[%s3 + $0x2] sm:$0x1]
    %v117 = vld [vmem:[%s3 + $0x3] sm:$0x1]
    %v118 = vld [vmem:[%s3 + $0x4] sm:$0x1]
    %119 = vmatpush.msra.mxu0 %v65
    %120 = vmatpush.msra.mxu0 %v64
    %121 = vmatpush.msra.mxu0 %v63
    %122 = vmatpush.msra.mxu0 %v62
    %123 = vmatpush.msra.mxu0 %v61
    %124 = vmatpush.msra.mxu0 %v60
    %125 = vmatpush.msra.mxu0 %v59
    %126 = vmatpush.msra.mxu0 %v58
    %127 = vmatpush.msra.mxu0 %v57
    %128 = vmatpush.msra.mxu0 %v56
    %129 = vmatpush.msra.mxu0 %v55
    %130 = vmatpush.msra.mxu0 %v54
    %131 = vmatpush.msra.mxu0 %v53
    %132 = vmatpush.msra.mxu0 %v52
    %133 = vmatpush.msra.mxu0 %v51
    %134 = vmatpush.msra.mxu0 %v50
    %135 = vmatmul.f32.gmra.mxu0 %v41
    %v136 = vpop.f32.mrf.mxu0
    %v137 = vadd.f32 0.0, %v136
    %138 = vmatmul.f32.gmra.mxu0 %v42
    %v139 = vpop.f32.mrf.mxu0
    %v140 = vadd.f32 0.0, %v139
    %141 = vmatmul.f32.gmra.mxu0 %v43
    %v142 = vpop.f32.mrf.mxu0
    %v143 = vadd.f32 0.0, %v142
    %144 = vmatmul.f32.gmra.mxu0 %v44
    %v145 = vpop.f32.mrf.mxu0
    %v146 = vadd.f32 0.0, %v145
    %147 = vmatmul.f32.gmra.mxu0 %v45
    %v148 = vpop.f32.mrf.mxu0
    %v149 = vadd.f32 0.0, %v148
    %150 = vmatmul.f32.gmra.mxu0 %v46
    %v151 = vpop.f32.mrf.mxu0
    %v152 = vadd.f32 0.0, %v151
    %153 = vmatmul.f32.gmra.mxu0 %v47
    %v154 = vpop.f32.mrf.mxu0
    %v155 = vadd.f32 0.0, %v154
    %156 = vmatmul.f32.gmra.mxu0 %v48
    %v157 = vpop.f32.mrf.mxu0
    %v158 = vadd.f32 0.0, %v157
    %159 = vdwg.mxu0
    %vm160 = vcmask 64512
    %v162 = vsel %vm160, %v33, 0
    %164 = vmatpush.msra.mxu0 0.0
    %165 = vmatpush.msra.mxu0 0.0
    %166 = vmatpush.msra.mxu0 0.0
    %167 = vmatpush.msra.mxu0 0.0
    %168 = vmatpush.msra.mxu0 0.0
    %169 = vmatpush.msra.mxu0 0.0
    %170 = vmatpush.msra.mxu0 0.0
    %171 = vmatpush.msra.mxu0 0.0
    %172 = vmatpush.msra.mxu0 0.0
    %173 = vmatpush.msra.mxu0 0.0
    %174 = vmatpush.msra.mxu0 0.0
    %175 = vmatpush.msra.mxu0 0.0
    %176 = vmatpush.msra.mxu0 0.0
    %177 = vmatpush.msra.mxu0 0.0
    %178 = vmatpush.msra.mxu0 0.0
    %179 = vmatpush.msra.mxu0 %v137
    %180 = vmatmul.f32.gmra.mxu0 %v162
    %v181 = vpop.f32.mrf.mxu0
    %v182 = vadd.f32 0.0, %v181
    %183 = vdwg.mxu0
    %v185 = vsel %vm160, %v34, 0
    %187 = vmatpush.msra.mxu0 0.0
    %188 = vmatpush.msra.mxu0 0.0
    %189 = vmatpush.msra.mxu0 0.0
    %190 = vmatpush.msra.mxu0 0.0
    %191 = vmatpush.msra.mxu0 0.0
    %192 = vmatpush.msra.mxu0 0.0
    %193 = vmatpush.msra.mxu0 0.0
    %194 = vmatpush.msra.mxu0 0.0
    %195 = vmatpush.msra.mxu0 0.0
    %196 = vmatpush.msra.mxu0 0.0
    %197 = vmatpush.msra.mxu0 0.0
    %198 = vmatpush.msra.mxu0 0.0
    %199 = vmatpush.msra.mxu0 0.0
    %200 = vmatpush.msra.mxu0 0.0
    %201 = vmatpush.msra.mxu0 0.0
    %202 = vmatpush.msra.mxu0 %v140
    %203 = vmatmul.f32.gmra.mxu0 %v185
    %v204 = vpop.f32.mrf.mxu0
    %v205 = vadd.f32 0.0, %v204
    %206 = vdwg.mxu0
    %v208 = vsel %vm160, %v35, 0
    %210 = vmatpush.msra.mxu0 0.0
    %211 = vmatpush.msra.mxu0 0.0
    %212 = vmatpush.msra.mxu0 0.0
    %213 = vmatpush.msra.mxu0 0.0
    %214 = vmatpush.msra.mxu0 0.0
    %215 = vmatpush.msra.mxu0 0.0
    %216 = vmatpush.msra.mxu0 0.0
    %217 = vmatpush.msra.mxu0 0.0
    %218 = vmatpush.msra.mxu0 0.0
    %219 = vmatpush.msra.mxu0 0.0
    %220 = vmatpush.msra.mxu0 0.0
    %221 = vmatpush.msra.mxu0 0.0
    %222 = vmatpush.msra.mxu0 0.0
    %223 = vmatpush.msra.mxu0 0.0
    %224 = vmatpush.msra.mxu0 0.0
    %225 = vmatpush.msra.mxu0 %v143
    %226 = vmatmul.f32.gmra.mxu0 %v208
    %v227 = vpop.f32.mrf.mxu0
    %v228 = vadd.f32 0.0, %v227
    %229 = vdwg.mxu0
    %v231 = vsel %vm160, %v36, 0
    %233 = vmatpush.msra.mxu0 0.0
    %234 = vmatpush.msra.mxu0 0.0
    %235 = vmatpush.msra.mxu0 0.0
    %236 = vmatpush.msra.mxu0 0.0
    %237 = vmatpush.msra.mxu0 0.0
    %238 = vmatpush.msra.mxu0 0.0
    %239 = vmatpush.msra.mxu0 0.0
    %240 = vmatpush.msra.mxu0 0.0
    %241 = vmatpush.msra.mxu0 0.0
    %242 = vmatpush.msra.mxu0 0.0
    %243 = vmatpush.msra.mxu0 0.0
    %244 = vmatpush.msra.mxu0 0.0
    %245 = vmatpush.msra.mxu0 0.0
    %246 = vmatpush.msra.mxu0 0.0
    %247 = vmatpush.msra.mxu0 0.0
    %248 = vmatpush.msra.mxu0 %v146
    %249 = vmatmul.f32.gmra.mxu0 %v231
    %v250 = vpop.f32.mrf.mxu0
    %v251 = vadd.f32 0.0, %v250
    %252 = vdwg.mxu0
    %v254 = vsel %vm160, %v37, 0
    %256 = vmatpush.msra.mxu0 0.0
    %257 = vmatpush.msra.mxu0 0.0
    %258 = vmatpush.msra.mxu0 0.0
    %259 = vmatpush.msra.mxu0 0.0
    %260 = vmatpush.msra.mxu0 0.0
    %261 = vmatpush.msra.mxu0 0.0
    %262 = vmatpush.msra.mxu0 0.0
    %263 = vmatpush.msra.mxu0 0.0
    %264 = vmatpush.msra.mxu0 0.0
    %265 = vmatpush.msra.mxu0 0.0
    %266 = vmatpush.msra.mxu0 0.0
    %267 = vmatpush.msra.mxu0 0.0
    %268 = vmatpush.msra.mxu0 0.0
    %269 = vmatpush.msra.mxu0 0.0
    %270 = vmatpush.msra.mxu0 0.0
    %271 = vmatpush.msra.mxu0 %v149
    %272 = vmatmul.f32.gmra.mxu0 %v254
    %v273 = vpop.f32.mrf.mxu0
    %v274 = vadd.f32 0.0, %v273
    %275 = vdwg.mxu0
    %v277 = vsel %vm160, %v38, 0
    %279 = vmatpush.msra.mxu0 0.0
    %280 = vmatpush.msra.mxu0 0.0
    %281 = vmatpush.msra.mxu0 0.0
    %282 = vmatpush.msra.mxu0 0.0
    %283 = vmatpush.msra.mxu0 0.0
    %284 = vmatpush.msra.mxu0 0.0
    %285 = vmatpush.msra.mxu0 0.0
    %286 = vmatpush.msra.mxu0 0.0
    %287 = vmatpush.msra.mxu0 0.0
    %288 = vmatpush.msra.mxu0 0.0
    %289 = vmatpush.msra.mxu0 0.0
    %290 = vmatpush.msra.mxu0 0.0
    %291 = vmatpush.msra.mxu0 0.0
    %292 = vmatpush.msra.mxu0 0.0
    %293 = vmatpush.msra.mxu0 0.0
    %294 = vmatpush.msra.mxu0 %v152
    %295 = vmatmul.f32.gmra.mxu0 %v277
    %v296 = vpop.f32.mrf.mxu0
    %v297 = vadd.f32 0.0, %v296
    %298 = vdwg.mxu0
    %v300 = vsel %vm160, %v39, 0
    %302 = vmatpush.msra.mxu0 0.0
    %303 = vmatpush.msra.mxu0 0.0
    %304 = vmatpush.msra.mxu0 0.0
    %305 = vmatpush.msra.mxu0 0.0
    %306 = vmatpush.msra.mxu0 0.0
    %307 = vmatpush.msra.mxu0 0.0
    %308 = vmatpush.msra.mxu0 0.0
    %309 = vmatpush.msra.mxu0 0.0
    %310 = vmatpush.msra.mxu0 0.0
    %311 = vmatpush.msra.mxu0 0.0
    %312 = vmatpush.msra.mxu0 0.0
    %313 = vmatpush.msra.mxu0 0.0
    %314 = vmatpush.msra.mxu0 0.0
    %315 = vmatpush.msra.mxu0 0.0
    %316 = vmatpush.msra.mxu0 0.0
    %317 = vmatpush.msra.mxu0 %v155
    %318 = vmatmul.f32.gmra.mxu0 %v300
    %v319 = vpop.f32.mrf.mxu0
    %v320 = vadd.f32 0.0, %v319
    %321 = vdwg.mxu0
    %v323 = vsel %vm160, %v40, 0
    %325 = vmatpush.msra.mxu0 0.0
    %326 = vmatpush.msra.mxu0 0.0
    %327 = vmatpush.msra.mxu0 0.0
    %328 = vmatpush.msra.mxu0 0.0
    %329 = vmatpush.msra.mxu0 0.0
    %330 = vmatpush.msra.mxu0 0.0
    %331 = vmatpush.msra.mxu0 0.0
    %332 = vmatpush.msra.mxu0 0.0
    %333 = vmatpush.msra.mxu0 0.0
    %334 = vmatpush.msra.mxu0 0.0
    %335 = vmatpush.msra.mxu0 0.0
    %336 = vmatpush.msra.mxu0 0.0
    %337 = vmatpush.msra.mxu0 0.0
    %338 = vmatpush.msra.mxu0 0.0
    %339 = vmatpush.msra.mxu0 0.0
    %340 = vmatpush.msra.mxu0 %v158
    %341 = vmatmul.f32.gmra.mxu0 %v323
    %v342 = vpop.f32.mrf.mxu0
    %v343 = vadd.f32 0.0, %v342
    %344 = vdwg.mxu0
    %v345 = vperm.slane %v114, 0
    %v346 = vadd.f32 %v182, %v345
    %v347 = vadd.f32 %v205, %v345
    %v348 = vadd.f32 %v228, %v345
    %v349 = vadd.f32 %v251, %v345
    %v350 = vadd.f32 %v274, %v345
    %v351 = vadd.f32 %v297, %v345
    %v352 = vadd.f32 %v320, %v345
    %v353 = vadd.f32 %v343, %v345
    %v354 = vmax.f32 %v346, 0.0
    %v355 = vmax.f32 %v347, 0.0
    %v356 = vmax.f32 %v348, 0.0
    %v357 = vmax.f32 %v349, 0.0
    %v358 = vmax.f32 %v350, 0.0
    %v359 = vmax.f32 %v351, 0.0
    %v360 = vmax.f32 %v352, 0.0
    %v361 = vmax.f32 %v353, 0.0
    %362 = vmatpush.msra.mxu0 %v81
    %363 = vmatpush.msra.mxu0 %v80
    %364 = vmatpush.msra.mxu0 %v79
    %365 = vmatpush.msra.mxu0 %v78
    %366 = vmatpush.msra.mxu0 %v77
    %367 = vmatpush.msra.mxu0 %v76
    %368 = vmatpush.msra.mxu0 %v75
    %369 = vmatpush.msra.mxu0 %v74
    %370 = vmatpush.msra.mxu0 %v73
    %371 = vmatpush.msra.mxu0 %v72
    %372 = vmatpush.msra.mxu0 %v71
    %373 = vmatpush.msra.mxu0 %v70
    %374 = vmatpush.msra.mxu0 %v69
    %375 = vmatpush.msra.mxu0 %v68
    %376 = vmatpush.msra.mxu0 %v67
    %377 = vmatpush.msra.mxu0 %v66
    %378 = vmatmul.f32.gmra.mxu0 %v354
    %v379 = vpop.f32.mrf.mxu0
    %v380 = vadd.f32 0.0, %v379
    %381 = vmatmul.f32.gmra.mxu0 %v355
    %v382 = vpop.f32.mrf.mxu0
    %v383 = vadd.f32 0.0, %v382
    %384 = vmatmul.f32.gmra.mxu0 %v356
    %v385 = vpop.f32.mrf.mxu0
    %v386 = vadd.f32 0.0, %v385
    %387 = vmatmul.f32.gmra.mxu0 %v357
    %v388 = vpop.f32.mrf.mxu0
    %v389 = vadd.f32 0.0, %v388
    %390 = vmatmul.f32.gmra.mxu0 %v358
    %v391 = vpop.f32.mrf.mxu0
    %v392 = vadd.f32 0.0, %v391
    %393 = vmatmul.f32.gmra.mxu0 %v359
    %v394 = vpop.f32.mrf.mxu0
    %v395 = vadd.f32 0.0, %v394
    %396 = vmatmul.f32.gmra.mxu0 %v360
    %v397 = vpop.f32.mrf.mxu0
    %v398 = vadd.f32 0.0, %v397
    %399 = vmatmul.f32.gmra.mxu0 %v361
    %v400 = vpop.f32.mrf.mxu0
    %v401 = vadd.f32 0.0, %v400
    %402 = vdwg.mxu0
    %403 = vmatpush.msra.mxu0 0.0
    %404 = vmatpush.msra.mxu0 0.0
    %405 = vmatpush.msra.mxu0 0.0
    %406 = vmatpush.msra.mxu0 0.0
    %407 = vmatpush.msra.mxu0 0.0
    %408 = vmatpush.msra.mxu0 0.0
    %409 = vmatpush.msra.mxu0 0.0
    %410 = vmatpush.msra.mxu0 0.0
    %411 = vmatpush.msra.mxu0 0.0
    %412 = vmatpush.msra.mxu0 0.0
    %413 = vmatpush.msra.mxu0 0.0
    %414 = vmatpush.msra.mxu0 0.0
    %415 = vmatpush.msra.mxu0 0.0
    %416 = vmatpush.msra.mxu0 0.0
    %417 = vmatpush.msra.mxu0 0.0
    %418 = vmatpush.msra.mxu0 %v380
    %419 = vmatmul.f32.gmra.mxu0 %v162
    %v420 = vpop.f32.mrf.mxu0
    %v421 = vadd.f32 0.0, %v420
    %422 = vdwg.mxu0
    %423 = vmatpush.msra.mxu0 0.0
    %424 = vmatpush.msra.mxu0 0.0
    %425 = vmatpush.msra.mxu0 0.0
    %426 = vmatpush.msra.mxu0 0.0
    %427 = vmatpush.msra.mxu0 0.0
    %428 = vmatpush.msra.mxu0 0.0
    %429 = vmatpush.msra.mxu0 0.0
    %430 = vmatpush.msra.mxu0 0.0
    %431 = vmatpush.msra.mxu0 0.0
    %432 = vmatpush.msra.mxu0 0.0
    %433 = vmatpush.msra.mxu0 0.0
    %434 = vmatpush.msra.mxu0 0.0
    %435 = vmatpush.msra.mxu0 0.0
    %436 = vmatpush.msra.mxu0 0.0
    %437 = vmatpush.msra.mxu0 0.0
    %438 = vmatpush.msra.mxu0 %v383
    %439 = vmatmul.f32.gmra.mxu0 %v185
    %v440 = vpop.f32.mrf.mxu0
    %v441 = vadd.f32 0.0, %v440
    %442 = vdwg.mxu0
    %443 = vmatpush.msra.mxu0 0.0
    %444 = vmatpush.msra.mxu0 0.0
    %445 = vmatpush.msra.mxu0 0.0
    %446 = vmatpush.msra.mxu0 0.0
    %447 = vmatpush.msra.mxu0 0.0
    %448 = vmatpush.msra.mxu0 0.0
    %449 = vmatpush.msra.mxu0 0.0
    %450 = vmatpush.msra.mxu0 0.0
    %451 = vmatpush.msra.mxu0 0.0
    %452 = vmatpush.msra.mxu0 0.0
    %453 = vmatpush.msra.mxu0 0.0
    %454 = vmatpush.msra.mxu0 0.0
    %455 = vmatpush.msra.mxu0 0.0
    %456 = vmatpush.msra.mxu0 0.0
    %457 = vmatpush.msra.mxu0 0.0
    %458 = vmatpush.msra.mxu0 %v386
    %459 = vmatmul.f32.gmra.mxu0 %v208
    %v460 = vpop.f32.mrf.mxu0
    %v461 = vadd.f32 0.0, %v460
    %462 = vdwg.mxu0
    %463 = vmatpush.msra.mxu0 0.0
    %464 = vmatpush.msra.mxu0 0.0
    %465 = vmatpush.msra.mxu0 0.0
    %466 = vmatpush.msra.mxu0 0.0
    %467 = vmatpush.msra.mxu0 0.0
    %468 = vmatpush.msra.mxu0 0.0
    %469 = vmatpush.msra.mxu0 0.0
    %470 = vmatpush.msra.mxu0 0.0
    %471 = vmatpush.msra.mxu0 0.0
    %472 = vmatpush.msra.mxu0 0.0
    %473 = vmatpush.msra.mxu0 0.0
    %474 = vmatpush.msra.mxu0 0.0
    %475 = vmatpush.msra.mxu0 0.0
    %476 = vmatpush.msra.mxu0 0.0
    %477 = vmatpush.msra.mxu0 0.0
    %478 = vmatpush.msra.mxu0 %v389
    %479 = vmatmul.f32.gmra.mxu0 %v231
    %v480 = vpop.f32.mrf.mxu0
    %v481 = vadd.f32 0.0, %v480
    %482 = vdwg.mxu0
    %483 = vmatpush.msra.mxu0 0.0
    %484 = vmatpush.msra.mxu0 0.0
    %485 = vmatpush.msra.mxu0 0.0
    %486 = vmatpush.msra.mxu0 0.0
    %487 = vmatpush.msra.mxu0 0.0
    %488 = vmatpush.msra.mxu0 0.0
    %489 = vmatpush.msra.mxu0 0.0
    %490 = vmatpush.msra.mxu0 0.0
    %491 = vmatpush.msra.mxu0 0.0
    %492 = vmatpush.msra.mxu0 0.0
    %493 = vmatpush.msra.mxu0 0.0
    %494 = vmatpush.msra.mxu0 0.0
    %495 = vmatpush.msra.mxu0 0.0
    %496 = vmatpush.msra.mxu0 0.0
    %497 = vmatpush.msra.mxu0 0.0
    %498 = vmatpush.msra.mxu0 %v392
    %499 = vmatmul.f32.gmra.mxu0 %v254
    %v500 = vpop.f32.mrf.mxu0
    %v501 = vadd.f32 0.0, %v500
    %502 = vdwg.mxu0
    %503 = vmatpush.msra.mxu0 0.0
    %504 = vmatpush.msra.mxu0 0.0
    %505 = vmatpush.msra.mxu0 0.0
    %506 = vmatpush.msra.mxu0 0.0
    %507 = vmatpush.msra.mxu0 0.0
    %508 = vmatpush.msra.mxu0 0.0
    %509 = vmatpush.msra.mxu0 0.0
    %510 = vmatpush.msra.mxu0 0.0
    %511 = vmatpush.msra.mxu0 0.0
    %512 = vmatpush.msra.mxu0 0.0
    %513 = vmatpush.msra.mxu0 0.0
    %514 = vmatpush.msra.mxu0 0.0
    %515 = vmatpush.msra.mxu0 0.0
    %516 = vmatpush.msra.mxu0 0.0
    %517 = vmatpush.msra.mxu0 0.0
    %518 = vmatpush.msra.mxu0 %v395
    %519 = vmatmul.f32.gmra.mxu0 %v277
    %v520 = vpop.f32.mrf.mxu0
    %v521 = vadd.f32 0.0, %v520
    %522 = vdwg.mxu0
    %523 = vmatpush.msra.mxu0 0.0
    %524 = vmatpush.msra.mxu0 0.0
    %525 = vmatpush.msra.mxu0 0.0
    %526 = vmatpush.msra.mxu0 0.0
    %527 = vmatpush.msra.mxu0 0.0
    %528 = vmatpush.msra.mxu0 0.0
    %529 = vmatpush.msra.mxu0 0.0
    %530 = vmatpush.msra.mxu0 0.0
    %531 = vmatpush.msra.mxu0 0.0
    %532 = vmatpush.msra.mxu0 0.0
    %533 = vmatpush.msra.mxu0 0.0
    %534 = vmatpush.msra.mxu0 0.0
    %535 = vmatpush.msra.mxu0 0.0
    %536 = vmatpush.msra.mxu0 0.0
    %537 = vmatpush.msra.mxu0 0.0
    %538 = vmatpush.msra.mxu0 %v398
    %539 = vmatmul.f32.gmra.mxu0 %v300
    %v540 = vpop.f32.mrf.mxu0
    %v541 = vadd.f32 0.0, %v540
    %542 = vdwg.mxu0
    %543 = vmatpush.msra.mxu0 0.0
    %544 = vmatpush.msra.mxu0 0.0
    %545 = vmatpush.msra.mxu0 0.0
    %546 = vmatpush.msra.mxu0 0.0
    %547 = vmatpush.msra.mxu0 0.0
    %548 = vmatpush.msra.mxu0 0.0
    %549 = vmatpush.msra.mxu0 0.0
    %550 = vmatpush.msra.mxu0 0.0
    %551 = vmatpush.msra.mxu0 0.0
    %552 = vmatpush.msra.mxu0 0.0
    %553 = vmatpush.msra.mxu0 0.0
    %554 = vmatpush.msra.mxu0 0.0
    %555 = vmatpush.msra.mxu0 0.0
    %556 = vmatpush.msra.mxu0 0.0
    %557 = vmatpush.msra.mxu0 0.0
    %558 = vmatpush.msra.mxu0 %v401
    %559 = vmatmul.f32.gmra.mxu0 %v323
    %v560 = vpop.f32.mrf.mxu0
    %v561 = vadd.f32 0.0, %v560
    %562 = vdwg.mxu0
    %v563 = vperm.slane %v115, 0
    %v564 = vadd.f32 %v421, %v563
    %v565 = vadd.f32 %v441, %v563
    %v566 = vadd.f32 %v461, %v563
    %v567 = vadd.f32 %v481, %v563
    %v568 = vadd.f32 %v501, %v563
    %v569 = vadd.f32 %v521, %v563
    %v570 = vadd.f32 %v541, %v563
    %v571 = vadd.f32 %v561, %v563
    %v572 = vmax.f32 %v564, 0.0
    %v573 = vmax.f32 %v565, 0.0
    %v574 = vmax.f32 %v566, 0.0
    %v575 = vmax.f32 %v567, 0.0
    %v576 = vmax.f32 %v568, 0.0
    %v577 = vmax.f32 %v569, 0.0
    %v578 = vmax.f32 %v570, 0.0
    %v579 = vmax.f32 %v571, 0.0
    %v580 = vld [vmem:[%s1] sm:$0xff]
    %vm581 = vcmask 523264
    %v583 = vsel %vm581, %v580, 0
    %585 = vmatpush.msra.mxu0 0.0
    %586 = vmatpush.msra.mxu0 0.0
    %587 = vmatpush.msra.mxu0 0.0
    %588 = vmatpush.msra.mxu0 0.0
    %589 = vmatpush.msra.mxu0 0.0
    %590 = vmatpush.msra.mxu0 0.0
    %591 = vmatpush.msra.mxu0 0.0
    %592 = vmatpush.msra.mxu0 0.0
    %593 = vmatpush.msra.mxu0 %v579
    %594 = vmatpush.msra.mxu0 %v578
    %595 = vmatpush.msra.mxu0 %v577
    %596 = vmatpush.msra.mxu0 %v576
    %597 = vmatpush.msra.mxu0 %v575
    %598 = vmatpush.msra.mxu0 %v574
    %599 = vmatpush.msra.mxu0 %v573
    %600 = vmatpush.msra.mxu0 %v572
    %601 = vmatmul.f32.gmra.mxu0 %v583
    %v602 = vpop.f32.mrf.mxu0
    %v603 = vadd.f32 0.0, %v602
    %604 = vdwg.mxu0
    %605 = vmatpush.msra.mxu0 %v113
    %606 = vmatpush.msra.mxu0 %v112
    %607 = vmatpush.msra.mxu0 %v111
    %608 = vmatpush.msra.mxu0 %v110
    %609 = vmatpush.msra.mxu0 %v109
    %610 = vmatpush.msra.mxu0 %v108
    %611 = vmatpush.msra.mxu0 %v107
    %612 = vmatpush.msra.mxu0 %v106
    %613 = vmatpush.msra.mxu0 %v105
    %614 = vmatpush.msra.mxu0 %v104
    %615 = vmatpush.msra.mxu0 %v103
    %616 = vmatpush.msra.mxu0 %v102
    %617 = vmatpush.msra.mxu0 %v101
    %618 = vmatpush.msra.mxu0 %v100
    %619 = vmatpush.msra.mxu0 %v99
    %620 = vmatpush.msra.mxu0 %v98
    %621 = vmatmul.f32.gmra.mxu0 %v49
    %v622 = vpop.f32.mrf.mxu0
    %v623 = vadd.f32 0.0, %v622
    %624 = vdwg.mxu0
    %625 = vmatpush.msra.mxu0 %v97
    %626 = vmatpush.msra.mxu0 %v96
    %627 = vmatpush.msra.mxu0 %v95
    %628 = vmatpush.msra.mxu0 %v94
    %629 = vmatpush.msra.mxu0 %v93
    %630 = vmatpush.msra.mxu0 %v92
    %631 = vmatpush.msra.mxu0 %v91
    %632 = vmatpush.msra.mxu0 %v90
    %633 = vmatpush.msra.mxu0 %v89
    %634 = vmatpush.msra.mxu0 %v88
    %635 = vmatpush.msra.mxu0 %v87
    %636 = vmatpush.msra.mxu0 %v86
    %637 = vmatpush.msra.mxu0 %v85
    %638 = vmatpush.msra.mxu0 %v84
    %639 = vmatpush.msra.mxu0 %v83
    %640 = vmatpush.msra.mxu0 %v82
    %641 = vmatmul.f32.gmra.mxu0 %v603
    %v642 = vpop.f32.mrf.mxu0
    %v643 = vadd.f32 %v623, %v642
    %644 = vdwg.mxu0
    %v645 = vperm.slane %v116, 0
    %v646 = vadd.f32 %v643, %v645
    %v647 = vmax.f32 %v646, 0.0
    %649 = vset.pattern.permute.xlu0 0
    %650 = vperm.xlu0 %649, %v118
    %v651 = vpop.permute.xlu0 %650
    %653 = vmatpush.xpose.msra.mxu0 0.0
    %654 = vmatpush.xpose.msra.mxu0 0.0
    %655 = vmatpush.xpose.msra.mxu0 0.0
    %656 = vmatpush.xpose.msra.mxu0 0.0
    %657 = vmatpush.xpose.msra.mxu0 0.0
    %658 = vmatpush.xpose.msra.mxu0 0.0
    %659 = vmatpush.xpose.msra.mxu0 0.0
    %660 = vmatpush.xpose.msra.mxu0 0.0
    %661 = vmatpush.xpose.msra.mxu0 0.0
    %662 = vmatpush.xpose.msra.mxu0 0.0
    %663 = vmatpush.xpose.msra.mxu0 0.0
    %664 = vmatpush.xpose.msra.mxu0 0.0
    %665 = vmatpush.xpose.msra.mxu0 0.0
    %666 = vmatpush.xpose.msra.mxu0 0.0
    %667 = vmatpush.xpose.msra.mxu0 0.0
    %668 = vmatpush.xpose.msra.mxu0 %v647
    %669 = vmatmul.f32.gmra.mxu0 %v117
    %v670 = vpop.f32.mrf.mxu0
    %v671 = vadd.f32 %v651, %v670
    %672 = vdwg.mxu0
    %vm673 = vcmask 57344
    %674 = vst.msk [vmem:[%s4] sm:$0x1] %vm673, %v671
    // Predicated region
    $region22: #{critic_forward.1} parent=1 // pred_check
      _
    $region23: #{critic_forward.1} parent=1 // pred_check_branch
      %676 = sbr.rel (0) target = $region25
    $region24: #{critic_forward.1} parent=1 // pred_region
      _
    $region25: #{critic_forward.1} parent=1 // pred_fallthru
      _
    // Predicated region
    $region26: #{critic_forward.1} parent=1 // pred_check
      _
    $region27: #{critic_forward.1} parent=1 // pred_check_branch
      %678 = sbr.rel (0) target = $region29
    $region28: #{critic_forward.1} parent=1 // pred_region
      _
    $region29: #{critic_forward.1} parent=1 // pred_fallthru
      _
    %679 = vsyncpa [#allocation3], 1

</llo_original>
